<compile_context>
chip_gen: v7x
topology: tpu7x:2x2x1
jax: 0.10.0
libtpu: 0.0.40
codegen_flags: <defaults>
</compile_context>

<pallas_src>
import functools

import jax
import jax.numpy as jnp
from jax import lax
from jax.experimental import pallas as pl
from jax.experimental.pallas import tpu as pltpu

LEAKY_SLOPE = 0.2
BN_EPS = 1e-5


# ----------------------------------------------------------------------------
# Pallas kernels -- lane-dense transposed layout: outputs are (Cout, M)
# ----------------------------------------------------------------------------
def _conv_act_kernel(w_ref, p_ref, o_ref, *, act):
    """out = act( W[(Cout,K)] @ patches_T[(K,tm)] ); M on the lane axis."""
    y = jnp.dot(w_ref[...].astype(jnp.bfloat16),
                p_ref[...].astype(jnp.bfloat16),
                preferred_element_type=jnp.float32)
    if act == "leaky":
        y = jnp.where(y > 0, y, LEAKY_SLOPE * y)
    elif act == "sigmoid":
        # numerically stable sigmoid (no exp overflow for very negative y)
        z = jnp.exp(-jnp.abs(y))
        inv = pl.reciprocal(1.0 + z)
        y = jnp.where(y >= 0, inv, z * inv)
    o_ref[...] = y


def _conv_bn_leaky_kernel(w_ref, p_ref, g_ref, b_ref, o_ref):
    """Fused conv matmul + training-mode BatchNorm2d + LeakyReLU for a
    (tc, M) slab of output channels.  Stats are per-channel, so splitting the
    channel axis across the grid is exact and fully parallel."""
    y = jnp.dot(w_ref[...].astype(jnp.bfloat16),
                p_ref[...].astype(jnp.bfloat16),
                preferred_element_type=jnp.float32)
    mean = jnp.mean(y, axis=1, keepdims=True)                 # (tc, 1)
    var = jnp.mean(jnp.square(y - mean), axis=1, keepdims=True)
    z = (y - mean) * (g_ref[...] * lax.rsqrt(var + BN_EPS)) + b_ref[...]
    o_ref[...] = jnp.where(z > 0, z, LEAKY_SLOPE * z)


# ----------------------------------------------------------------------------
# Glue: channel-first im2col (pure layout plumbing, stays in XLA) + drivers
# ----------------------------------------------------------------------------
def im2col_cfirst(x, ksize, stride, pad):
    """x: (C, N, H, W) -> patches_T: (C*k*k, N*Ho*Wo), feature order (ci,kh,kw)
    so it matches w.reshape(Cout, Cin*k*k) for PyTorch-layout conv weights."""
    C, N, H, W = x.shape
    Ho = (H + 2 * pad - ksize) // stride + 1
    Wo = (W + 2 * pad - ksize) // stride + 1
    xp = jnp.pad(x, ((0, 0), (0, 0), (pad, pad), (pad, pad)))
    slices = []
    for kh in range(ksize):
        for kw in range(ksize):
            s = xp[:, :, kh:kh + Ho * stride:stride, kw:kw + Wo * stride:stride]
            slices.append(s.reshape(C, N * Ho * Wo))          # (C, M)
    pat = jnp.stack(slices, axis=1).reshape(C * ksize * ksize, N * Ho * Wo)
    return pat, (N, Ho, Wo)


def conv_act(x, w, *, stride, pad, act, m_split=1):
    """x: (Cin, N, H, W); w: PyTorch layout (Cout, Cin, k, k).
    Returns (Cout, N, Ho, Wo).  Grid splits the lane (M) axis."""
    cout, cin, k, _ = w.shape
    pat, (n, ho, wo) = im2col_cfirst(x, k, stride, pad)
    K, M = pat.shape
    wm = w.reshape(cout, cin * k * k).astype(jnp.float32)
    assert M % m_split == 0
    tm = M // m_split
    out = pl.pallas_call(
        functools.partial(_conv_act_kernel, act=act),
        out_shape=jax.ShapeDtypeStruct((cout, M), jnp.float32),
        grid_spec=pltpu.PrefetchScalarGridSpec(
            num_scalar_prefetch=0,
            grid=(m_split,),
            in_specs=[
                pl.BlockSpec((cout, K), lambda i: (0, 0)),
                pl.BlockSpec((K, tm), lambda i: (0, i)),
            ],
            out_specs=pl.BlockSpec((cout, tm), lambda i: (0, i)),
        ),
        compiler_params=pltpu.CompilerParams(dimension_semantics=("parallel",)),
    )(wm, pat)
    return out.reshape(cout, n, ho, wo)


def conv_bn_leaky(x, w, gamma, beta, *, stride=2, pad=1, c_split=1):
    """Fused conv -> BatchNorm (batch stats) -> LeakyReLU.
    Grid splits the output-channel axis (stats are per-channel)."""
    cout, cin, k, _ = w.shape
    pat, (n, ho, wo) = im2col_cfirst(x, k, stride, pad)
    K, M = pat.shape
    wm = w.reshape(cout, cin * k * k).astype(jnp.float32)
    g = gamma.reshape(cout, 1).astype(jnp.float32)
    b = beta.reshape(cout, 1).astype(jnp.float32)
    assert cout % c_split == 0
    tc = cout // c_split
    out = pl.pallas_call(
        _conv_bn_leaky_kernel,
        out_shape=jax.ShapeDtypeStruct((cout, M), jnp.float32),
        grid_spec=pltpu.PrefetchScalarGridSpec(
            num_scalar_prefetch=0,
            grid=(c_split,),
            in_specs=[
                pl.BlockSpec((tc, K), lambda i: (i, 0)),
                pl.BlockSpec((K, M), lambda i: (0, 0)),
                pl.BlockSpec((tc, 1), lambda i: (i, 0)),
                pl.BlockSpec((tc, 1), lambda i: (i, 0)),
            ],
            out_specs=pl.BlockSpec((tc, M), lambda i: (i, 0)),
        ),
        compiler_params=pltpu.CompilerParams(dimension_semantics=("parallel",)),
    )(wm, pat, g, b)
    return out.reshape(cout, n, ho, wo)


def discriminator_forward(params, x_nchw, labels=None):
    """x_nchw: (N, C, H, W) float32, labels: (N,) int32 or None."""
    x = jnp.transpose(x_nchw, (1, 0, 2, 3))          # NCHW -> (C, N, H, W)
    if labels is not None:
        n, _, h, w_ = x_nchw.shape
        emb = params["embed"][labels]                 # (N, image_dim*image_dim)
        emb = emb.reshape(n, h, w_)[None]             # (1, N, H, W) == view(N,1,H,W)
        x = jnp.concatenate([x, emb], axis=0)

    # block 1: conv + LeakyReLU (no BN), M = 2048 split into two lane-dense tiles
    x = conv_act(x, params["w1"], stride=2, pad=1, act="leaky", m_split=2)
    # blocks 2-4: conv -> BatchNorm -> LeakyReLU, one fused kernel each,
    # 2 parallel grid steps over output channels
    x = conv_bn_leaky(x, params["w2"], params["g2"], params["b2"], c_split=2)
    x = conv_bn_leaky(x, params["w3"], params["g3"], params["b3"], c_split=2)
    x = conv_bn_leaky(x, params["w4"], params["g4"], params["b4"], c_split=2)
    # final conv (4x4, stride 1, pad 0) + sigmoid -> (1, N, 1, 1)
    y = conv_act(x, params["w5"], stride=1, pad=0, act="sigmoid", m_split=1)
    # .view(-1, 1).squeeze(1)
    return y.reshape(-1)


# ----------------------------------------------------------------------------
# Deterministic parameter construction (synthetic; no checkpoint load)
# ----------------------------------------------------------------------------
def init_params(key, ndf, channels_dim, conditional, num_classes, image_dim):
    cin = channels_dim + (1 if conditional else 0)
    ks = jax.random.split(key, 12)
    nrm = lambda k, s: (0.02 * jax.random.normal(k, s)).astype(jnp.float32)
    params = {
        "w1": nrm(ks[0], (ndf, cin, 4, 4)),
        "w2": nrm(ks[1], (ndf * 2, ndf, 4, 4)),
        "w3": nrm(ks[2], (ndf * 4, ndf * 2, 4, 4)),
        "w4": nrm(ks[3], (ndf * 8, ndf * 4, 4, 4)),
        "w5": nrm(ks[4], (1, ndf * 8, 4, 4)),
        "g2": 1.0 + nrm(ks[5], (ndf * 2,)),
        "b2": nrm(ks[6], (ndf * 2,)),
        "g3": 1.0 + nrm(ks[7], (ndf * 4,)),
        "b3": nrm(ks[8], (ndf * 4,)),
        "g4": 1.0 + nrm(ks[9], (ndf * 8,)),
        "b4": nrm(ks[10], (ndf * 8,)),
    }
    if conditional:
        params["embed"] = nrm(ks[11], (num_classes, image_dim * image_dim))
    return params


if __name__ == "__main__":
    # Small config: the 4x(stride-2) + final 4x4 valid conv requires 64x64 input.
    batch, channels_dim, ndf = 2, 3, 8
    conditional, num_classes, image_dim = True, 4, 64

    key = jax.random.PRNGKey(0)
    k_par, k_x, k_lab = jax.random.split(key, 3)
    params = init_params(k_par, ndf, channels_dim, conditional, num_classes, image_dim)

    x = jax.random.normal(k_x, (batch, channels_dim, image_dim, image_dim),
                          jnp.float32)               # NCHW, like the PyTorch module
    labels = jax.random.randint(k_lab, (batch,), 0, num_classes, jnp.int32)

    out = discriminator_forward(params, x, labels)
    out = jax.block_until_ready(out)

    assert out.shape == (batch,), out.shape
    assert bool(jnp.all(jnp.isfinite(out)))
    assert bool(jnp.all((out >= 0.0) & (out <= 1.0)))  # sigmoid output
    print("KERNEL_OK")
</pallas_src>

<mosaic_0001>
module attributes {stable_mosaic.version = 11 : i64} {
  func.func @_conv_act_kernel(%arg0: i32, %arg1: memref<8x64xf32, #tpu.memory_space<vmem>>, %arg2: memref<64x1024xf32, #tpu.memory_space<vmem>>, %arg3: memref<8x1024xf32, #tpu.memory_space<vmem>>) attributes {dimension_semantics = [#tpu.dimension_semantics<parallel>], iteration_bounds = array<i64: 2>, scalar_prefetch = 0 : i64, scratch_operands = 0 : i64, tpu.core_type = #tpu.core_type<tc>, window_params = [{pipeline_mode = #tpu.pipeline_mode<synchronous>, transform_indices = @transform_0, window_bounds = array<i64: 8, 64>}, {transform_indices = @transform_1, window_bounds = array<i64: 64, 1024>}, {transform_indices = @transform_2, window_bounds = array<i64: 8, 1024>}]} {
    %c0 = arith.constant 0 : index
    %c0_0 = arith.constant 0 : index
    %0 = vector.load %arg1[%c0, %c0_0] : memref<8x64xf32, #tpu.memory_space<vmem>>, vector<8x64xf32>
    %1 = arith.truncf %0 : vector<8x64xf32> to vector<8x64xbf16>
    %c0_1 = arith.constant 0 : index
    %c0_2 = arith.constant 0 : index
    %2 = vector.load %arg2[%c0_1, %c0_2] : memref<64x1024xf32, #tpu.memory_space<vmem>>, vector<64x1024xf32>
    %3 = arith.truncf %2 : vector<64x1024xf32> to vector<64x1024xbf16>
    %cst = arith.constant dense<0.000000e+00> : vector<8x1024xf32>
    %4 = tpu.matmul %1, %3, %cst {dimension_numbers = #tpu.dot_dimension_numbers<[1], [0], [0], [1], [0, 0, 1, 1], [], []>} : vector<8x64xbf16>, vector<64x1024xbf16>, vector<8x1024xf32> -> vector<8x1024xf32>
    %cst_3 = arith.constant 0.000000e+00 : f32
    %5 = vector.broadcast %cst_3 : f32 to vector<8x1024xf32>
    %6 = arith.cmpf ogt, %4, %5 : vector<8x1024xf32>
    %cst_4 = arith.constant 2.000000e-01 : f32
    %7 = vector.broadcast %cst_4 : f32 to vector<8x1024xf32>
    %8 = arith.mulf %7, %4 : vector<8x1024xf32>
    %9 = arith.select %6, %4, %8 : vector<8x1024xi1>, vector<8x1024xf32>
    %c0_5 = arith.constant 0 : index
    %c0_6 = arith.constant 0 : index
    %10 = vector.load %arg3[%c0_5, %c0_6] : memref<8x1024xf32, #tpu.memory_space<vmem>>, vector<8x1024xf32>
    tpu.vector_store %arg3[%c0_5, %c0_6], %9 {strides = array<i32>} : memref<8x1024xf32, #tpu.memory_space<vmem>>, vector<8x1024xf32>,
    return
  }
  func.func @transform_0(%arg0: i32) -> (i32, i32) {
    %c0_i32 = arith.constant 0 : i32
    %c0_i32_0 = arith.constant 0 : i32
    %c0_i32_1 = arith.constant 0 : i32
    return %c0_i32, %c0_i32_0 : i32, i32
  }
  func.func @transform_1(%arg0: i32) -> (i32, i32) {
    %c0_i32 = arith.constant 0 : i32
    %c0_i32_0 = arith.constant 0 : i32
    return %c0_i32, %arg0 : i32, i32
  }
  func.func @transform_2(%arg0: i32) -> (i32, i32) {
    %c0_i32 = arith.constant 0 : i32
    %c0_i32_0 = arith.constant 0 : i32
    return %c0_i32, %arg0 : i32, i32
  }
}

</mosaic_0001>

<llo_original>
// kernel: tpu_custom_call.1
$region0: #{tpu_custom_call.1}
  #allocation0 [shape = 'u32[]', space=smem, size = 0x4, offset = 0x4, fixed_abs, tag = 'smem constant byte address 0x4 - core index']
  #allocation1 [shape = 'u32[144,128]{1,0:T(1,128)}', space=vmem, size = 0x12000, scoped, tag = 'internal scratch']
  %s0 = inlined_call_operand.hbm [shape: f32[8,64], index: 0, kind: input, shape index: {}]
  %s1 = inlined_call_operand.hbm [shape: f32[64,2048], index: 1, kind: input, shape index: {}]
  %s2 = inlined_call_operand.hbm [shape: f32[8,2048], index: 2, kind: output, shape index: {}]
  %s3 = sld [smem:[#allocation0]]
  $region49: #{tpu_custom_call.1} parent=0
    _
  %s5 = ssub.s32 1, %s3
  %s6 = scalar_select 0, %s5, %s3
  $region1: #{tpu_custom_call.1} parent=0
    #allocation2 [shape = 'u8[4096]{0}', space=vmem, size = 0x1000, scoped, tag = 'input window, operand 0, single buffered']
    #allocation3 [shape = 's32[2]{0}', space=sflag, size = 0x8, scoped, tag = 'scoped memory for tpu_custom_call.1']
    #allocation4 [shape = 's32[2]{0}', space=sflag, size = 0x8, scoped, tag = 'scoped memory for tpu_custom_call.1']
    #allocation5 [shape = 'u8[524288]{0}', space=vmem, size = 0x80000, scoped, tag = 'input window, operand 1']
    #allocation6 [shape = 's32[2]{0}', space=sflag, size = 0x8, scoped, tag = 'scoped memory for tpu_custom_call.1']
    #allocation7 [shape = 'u8[65536]{0}', space=vmem, size = 0x10000, scoped, tag = 'output window, operand 0']
    %7 = vsyncpa [#allocation3], 0
    %8 = vsyncpa [#allocation6], 0
    %s9 = scalar_lea.sflag [#allocation6], 1
    %10 = vsyncpa %s9, 0
    %11 = vsyncpa [#allocation4], 0
    %s12 = scalar_lea.sflag [#allocation4], 1
    %13 = vsyncpa %s12, 0
    loop: start=0, step=1, limit=4
    $region2: #{tpu_custom_call.1} parent=1 // loop_pre_header
      _
    $region3: #{tpu_custom_call.1} parent=1 // loop_header
      %s15 = sphi 0, %s19
      %p16 = scmp.ge.s32.totalorder %s15, 4
      %s23 = sphi 0, %s23
      %s25 = sphi 0, %s23
      %s26 = sphi 0, %s25
      %s40 = sphi 0, %s26
      %s46 = sphi 0, %s48
      %s49 = sphi 0, %s46
      %s50 = sphi 0, %s49
      %s66 = sphi 0, %s50
      %s72 = sphi 0, %s74
      %s75 = sphi 0, %s72
      %s76 = sphi 0, %s75
      %s92 = sphi 0, %s76
    $region4: #{tpu_custom_call.1} parent=1 // loop_header_branch
      %18 = sbr.rel (%p16) target = $region8
    $region5: #{tpu_custom_call.1} parent=1 // loop_body
      %s20 = ssub.s32 %s15, 1
      %s21 = ssub.s32 %s15, 2
      %s22 = sadd.s32 %s15, 1
      %s24 = sadd.s32 %s23, 1
      %p27 = scmp.eq.s32.totalorder %s15, 1
      %p28 = scmp.ne.s32.totalorder %s23, %s25
      %p29 = scmp.eq.s32.totalorder %s15, 0
      %p30 = por %p28, %p29
      %p31 = scmp.ne.s32.totalorder %s23, %s25
      %p32 = scmp.eq.s32.totalorder %s20, 1
      %p33 = por %p31, %p32
      %p34 = scmp.ne.s32.totalorder %s25, %s26
      %p35 = scmp.eq.s32.totalorder %s20, 0
      %p36 = por %p34, %p35
      %p37 = scmp.ne.s32.totalorder %s25, %s26
      %p38 = scmp.eq.s32.totalorder %s21, 1
      %p39 = por %p37, %p38
      %p41 = scmp.ne.s32.totalorder %s26, %s40
      %p42 = scmp.eq.s32.totalorder %s21, 0
      %p43 = por %p41, %p42
      %s44 = ssub.s32 %s15, %s22
      %p45 = scmp.eq.s32.totalorder %s44, 0
      %s47 = sadd.s32 %s46, 1
      %s48 = scalar_select %p45, %s46, %s47
      %p51 = pneg %p45
      %p52 = scmp.eq.s32.totalorder %s15, 1
      %p53 = por %p51, %p52
      %p54 = scmp.ne.s32.totalorder %s46, %s49
      %p55 = scmp.eq.s32.totalorder %s15, 0
      %p56 = por %p54, %p55
      %p57 = scmp.ne.s32.totalorder %s46, %s49
      %p58 = scmp.eq.s32.totalorder %s20, 1
      %p59 = por %p57, %p58
      %p60 = scmp.ne.s32.totalorder %s49, %s50
      %p61 = scmp.eq.s32.totalorder %s20, 0
      %p62 = por %p60, %p61
      %p63 = scmp.ne.s32.totalorder %s49, %s50
      %p64 = scmp.eq.s32.totalorder %s21, 1
      %p65 = por %p63, %p64
      %p67 = scmp.ne.s32.totalorder %s50, %s66
      %p68 = scmp.eq.s32.totalorder %s21, 0
      %p69 = por %p67, %p68
      %s70 = ssub.s32 %s15, %s22
      %p71 = scmp.eq.s32.totalorder %s70, 0
      %s73 = sadd.s32 %s72, 1
      %s74 = scalar_select %p71, %s72, %s73
      %p77 = pneg %p71
      %p78 = scmp.eq.s32.totalorder %s15, 1
      %p79 = por %p77, %p78
      %p80 = scmp.ne.s32.totalorder %s72, %s75
      %p81 = scmp.eq.s32.totalorder %s15, 0
      %p82 = por %p80, %p81
      %p83 = scmp.ne.s32.totalorder %s72, %s75
      %p84 = scmp.eq.s32.totalorder %s20, 1
      %p85 = por %p83, %p84
      %p86 = scmp.ne.s32.totalorder %s75, %s76
      %p87 = scmp.eq.s32.totalorder %s20, 0
      %p88 = por %p86, %p87
      %p89 = scmp.ne.s32.totalorder %s75, %s76
      %p90 = scmp.eq.s32.totalorder %s21, 1
      %p91 = por %p89, %p90
      %p93 = scmp.ne.s32.totalorder %s76, %s92
      %p94 = scmp.eq.s32.totalorder %s21, 0
      %p95 = por %p93, %p94
      %p96 = scmp.le.s32.totalorder 1, %s15
      %p97 = scmp.lt.s32.totalorder %s15, 3
      %p98 = pnand %p96, %p97
      %p99 = pneg %p98
      // Predicated region
      $region9: #{tpu_custom_call.1} parent=5 // pred_check
        _
      $region10: #{tpu_custom_call.1} parent=5 // pred_check_branch
        %101 = sbr.rel (%p98) target = $region12
      $region11: #{tpu_custom_call.1} parent=5 // pred_region
        %s102 = ssub.s32 %s15, 1
        // Predicated region
        $region13: #{tpu_custom_call.1} parent=11 // pred_check
          %p103 = pneg %p36
        $region14: #{tpu_custom_call.1} parent=11 // pred_check_branch
          %105 = sbr.rel (%p103) target = $region16
        $region15: #{tpu_custom_call.1} parent=11 // pred_region
          %s107 = ssub.s32 128, 128
          %108 = vsyncadd [#allocation3], %s107
          %s110 = sshll.u32 [#allocation2], 4
          %s111 = int_to_ptr.vmem [resolvable:$true] %s110
          %113 = dma.hbm_to_vmem [thread:$0]  %s0, 128, %s111, [#allocation3]
        $region16: #{tpu_custom_call.1} parent=11 // pred_fallthru
          _
      $region12: #{tpu_custom_call.1} parent=5 // pred_fallthru
        _
      %p114 = scmp.lt.s32.totalorder %s15, 2
      // Predicated region
      $region17: #{tpu_custom_call.1} parent=5 // pred_check
        %p115 = pneg %p114
      $region18: #{tpu_custom_call.1} parent=5 // pred_check_branch
        %117 = sbr.rel (%p115) target = $region20
      $region19: #{tpu_custom_call.1} parent=5 // pred_region
        // Predicated region
        $region21: #{tpu_custom_call.1} parent=19 // pred_check
          %p118 = pneg %p56
        $region22: #{tpu_custom_call.1} parent=19 // pred_check_branch
          %120 = sbr.rel (%p118) target = $region24
        $region23: #{tpu_custom_call.1} parent=19 // pred_region
          %s121 = sand.u32 %s46, 1
          %s122 = scalar_lea.sflag [#allocation6], %s121
          %s123 = sand.u32 %s46, 1
          %s124 = smul.addr %s123, 512
          %s125 = scalar_lea.vmem [#allocation5], %s124
          %s126 = smul.u32 8, %s15
          %s128 = ssub.s32 8192, 8192
          %129 = vsyncadd %s122, %s128
          %s130 = smul.addr %s126, 128
          %s131 = scalar_lea.hbm %s1, %s130
          %s132 = sshll.u32 %s125, 4
          %s133 = int_to_ptr.vmem [resolvable:$true] %s132
          %138 = dma.hbm_to_vmem [thread:$0]  %s131, 8192, %s133, %s122, 2048, 1024, 64
        $region24: #{tpu_custom_call.1} parent=19 // pred_fallthru
          _
      $region20: #{tpu_custom_call.1} parent=5 // pred_fallthru
        _
      %p139 = scmp.le.s32.totalorder 1, %s15
      %p140 = scmp.lt.s32.totalorder %s15, 3
      %p141 = pnand %p139, %p140
      %p142 = pneg %p141
      // Predicated region
      $region25: #{tpu_custom_call.1} parent=5 // pred_check
        _
      $region26: #{tpu_custom_call.1} parent=5 // pred_check_branch
        %144 = sbr.rel (%p141) target = $region28
      $region27: #{tpu_custom_call.1} parent=5 // pred_region
        %s145 = ssub.s32 %s15, 1
        // Predicated region
        $region29: #{tpu_custom_call.1} parent=27 // pred_check
          %p146 = pneg %p36
        $region30: #{tpu_custom_call.1} parent=27 // pred_check_branch
          %148 = sbr.rel (%p146) target = $region32
        $region31: #{tpu_custom_call.1} parent=27 // pred_region
          %149 = dma.done [#allocation3], 128
        $region32: #{tpu_custom_call.1} parent=27 // pred_fallthru
          _
        %s150 = sand.u32 %s49, 1
        %s151 = scalar_lea.sflag [#allocation6], %s150
        %s152 = sand.u32 %s49, 1
        %s153 = smul.addr %s152, 512
        %s154 = scalar_lea.vmem [#allocation5], %s153
        // Predicated region
        $region33: #{tpu_custom_call.1} parent=27 // pred_check
          %p155 = pneg %p62
        $region34: #{tpu_custom_call.1} parent=27 // pred_check_branch
          %157 = sbr.rel (%p155) target = $region36
        $region35: #{tpu_custom_call.1} parent=27 // pred_region
          %158 = dma.done %s151, 8192
        $region36: #{tpu_custom_call.1} parent=27 // pred_fallthru
          _
        %p159 = pneg %p36
        %p160 = pneg %p33
        %s161 = sand.u32 %s49, 1
        %s162 = scalar_lea.sflag [#allocation6], %s161
        %s163 = sand.u32 %s49, 1
        %s164 = smul.addr %s163, 512
        %s165 = scalar_lea.vmem [#allocation5], %s164
        %p166 = pneg %p62
        %p167 = pneg %p59
        %p168 = pneg %p88
        %p169 = pneg %p85
        %s170 = sand.u32 %s75, 1
        %s171 = scalar_lea.sflag [#allocation4], %s170
        %s172 = sand.u32 %s75, 1
        %s173 = smul.addr %s172, 64
        %s174 = scalar_lea.vmem [#allocation7], %s173
        %s175 = smul.u32 8, %s20
        %s176 = smul.u32 8, %s20
        %v178 = vld [vmem:[#allocation2] sm:$0xff]
        %v179 = vpack.c.bf16 %v178, %v178
        %v180 = vld [vmem:[%s154] sm:$0xff]
        %v181 = vld [vmem:[%s154 + $0x8] sm:$0xff]
        %v182 = vld [vmem:[%s154 + $0x10] sm:$0xff]
        %v183 = vld [vmem:[%s154 + $0x18] sm:$0xff]
        %v184 = vld [vmem:[%s154 + $0x20] sm:$0xff]
        %v185 = vld [vmem:[%s154 + $0x28] sm:$0xff]
        %v186 = vld [vmem:[%s154 + $0x30] sm:$0xff]
        %v187 = vld [vmem:[%s154 + $0x38] sm:$0xff]
        %v188 = vld [vmem:[%s154 + $0x40] sm:$0xff]
        %v189 = vld [vmem:[%s154 + $0x48] sm:$0xff]
        %v190 = vld [vmem:[%s154 + $0x50] sm:$0xff]
        %v191 = vld [vmem:[%s154 + $0x58] sm:$0xff]
        %v192 = vld [vmem:[%s154 + $0x60] sm:$0xff]
        %v193 = vld [vmem:[%s154 + $0x68] sm:$0xff]
        %v194 = vld [vmem:[%s154 + $0x70] sm:$0xff]
        %v195 = vld [vmem:[%s154 + $0x78] sm:$0xff]
        %v196 = vld [vmem:[%s154 + $0x80] sm:$0xff]
        %v197 = vld [vmem:[%s154 + $0x88] sm:$0xff]
        %v198 = vld [vmem:[%s154 + $0x90] sm:$0xff]
        %v199 = vld [vmem:[%s154 + $0x98] sm:$0xff]
        %v200 = vld [vmem:[%s154 + $0xa0] sm:$0xff]
        %v201 = vld [vmem:[%s154 + $0xa8] sm:$0xff]
        %v202 = vld [vmem:[%s154 + $0xb0] sm:$0xff]
        %v203 = vld [vmem:[%s154 + $0xb8] sm:$0xff]
        %v204 = vld [vmem:[%s154 + $0xc0] sm:$0xff]
        %v205 = vld [vmem:[%s154 + $0xc8] sm:$0xff]
        %v206 = vld [vmem:[%s154 + $0xd0] sm:$0xff]
        %v207 = vld [vmem:[%s154 + $0xd8] sm:$0xff]
        %v208 = vld [vmem:[%s154 + $0xe0] sm:$0xff]
        %v209 = vld [vmem:[%s154 + $0xe8] sm:$0xff]
        %v210 = vld [vmem:[%s154 + $0xf0] sm:$0xff]
        %v211 = vld [vmem:[%s154 + $0xf8] sm:$0xff]
        %v212 = vld [vmem:[%s154 + $0x100] sm:$0xff]
        %v213 = vld [vmem:[%s154 + $0x108] sm:$0xff]
        %v214 = vld [vmem:[%s154 + $0x110] sm:$0xff]
        %v215 = vld [vmem:[%s154 + $0x118] sm:$0xff]
        %v216 = vld [vmem:[%s154 + $0x120] sm:$0xff]
        %v217 = vld [vmem:[%s154 + $0x128] sm:$0xff]
        %v218 = vld [vmem:[%s154 + $0x130] sm:$0xff]
        %v219 = vld [vmem:[%s154 + $0x138] sm:$0xff]
        %v220 = vld [vmem:[%s154 + $0x140] sm:$0xff]
        %v221 = vld [vmem:[%s154 + $0x148] sm:$0xff]
        %v222 = vld [vmem:[%s154 + $0x150] sm:$0xff]
        %v223 = vld [vmem:[%s154 + $0x158] sm:$0xff]
        %v224 = vld [vmem:[%s154 + $0x160] sm:$0xff]
        %v225 = vld [vmem:[%s154 + $0x168] sm:$0xff]
        %v226 = vld [vmem:[%s154 + $0x170] sm:$0xff]
        %v227 = vld [vmem:[%s154 + $0x178] sm:$0xff]
        %v228 = vld [vmem:[%s154 + $0x180] sm:$0xff]
        %v229 = vld [vmem:[%s154 + $0x188] sm:$0xff]
        %v230 = vld [vmem:[%s154 + $0x190] sm:$0xff]
        %v231 = vld [vmem:[%s154 + $0x198] sm:$0xff]
        %v232 = vld [vmem:[%s154 + $0x1a0] sm:$0xff]
        %v233 = vld [vmem:[%s154 + $0x1a8] sm:$0xff]
        %v234 = vld [vmem:[%s154 + $0x1b0] sm:$0xff]
        %v235 = vld [vmem:[%s154 + $0x1b8] sm:$0xff]
        %v236 = vld [vmem:[%s154 + $0x1c0] sm:$0xff]
        %v237 = vld [vmem:[%s154 + $0x1c8] sm:$0xff]
        %v238 = vld [vmem:[%s154 + $0x1d0] sm:$0xff]
        %v239 = vld [vmem:[%s154 + $0x1d8] sm:$0xff]
        %v240 = vld [vmem:[%s154 + $0x1e0] sm:$0xff]
        %v241 = vld [vmem:[%s154 + $0x1e8] sm:$0xff]
        %v242 = vld [vmem:[%s154 + $0x1f0] sm:$0xff]
        %v243 = vld [vmem:[%s154 + $0x1f8] sm:$0xff]
        %v244 = vpack.c.bf16 %v188, %v180
        %v245 = vpack.c.bf16 %v189, %v181
        %v246 = vpack.c.bf16 %v190, %v182
        %v247 = vpack.c.bf16 %v191, %v183
        %v248 = vpack.c.bf16 %v192, %v184
        %v249 = vpack.c.bf16 %v193, %v185
        %v250 = vpack.c.bf16 %v194, %v186
        %v251 = vpack.c.bf16 %v195, %v187
        %v252 = vpack.c.bf16 %v204, %v196
        %v253 = vpack.c.bf16 %v205, %v197
        %v254 = vpack.c.bf16 %v206, %v198
        %v255 = vpack.c.bf16 %v207, %v199
        %v256 = vpack.c.bf16 %v208, %v200
        %v257 = vpack.c.bf16 %v209, %v201
        %v258 = vpack.c.bf16 %v210, %v202
        %v259 = vpack.c.bf16 %v211, %v203
        %v260 = vpack.c.bf16 %v220, %v212
        %v261 = vpack.c.bf16 %v221, %v213
        %v262 = vpack.c.bf16 %v222, %v214
        %v263 = vpack.c.bf16 %v223, %v215
        %v264 = vpack.c.bf16 %v224, %v216
        %v265 = vpack.c.bf16 %v225, %v217
        %v266 = vpack.c.bf16 %v226, %v218
        %v267 = vpack.c.bf16 %v227, %v219
        %v268 = vpack.c.bf16 %v236, %v228
        %v269 = vpack.c.bf16 %v237, %v229
        %v270 = vpack.c.bf16 %v238, %v230
        %v271 = vpack.c.bf16 %v239, %v231
        %v272 = vpack.c.bf16 %v240, %v232
        %v273 = vpack.c.bf16 %v241, %v233
        %v274 = vpack.c.bf16 %v242, %v234
        %v275 = vpack.c.bf16 %v243, %v235
        %vm276 = vcmask 523264
        %v278 = vsel %vm276, %v179, 0
        %280 = vmatprep.subr.bf16.mxu0 %v245
        %281 = vmatpush1.bf16.msra.mxu0 %v244
        %282 = vmatprep.subr.bf16.mxu0 %v253
        %283 = vmatpush1.bf16.msra.mxu0 %v252
        %284 = vmatprep.subr.bf16.mxu0 %v261
        %285 = vmatpush1.bf16.msra.mxu0 %v260
        %286 = vmatprep.subr.bf16.mxu0 %v269
        %287 = vmatpush1.bf16.msra.mxu0 %v268
        %288 = vmatprep.subr.bf16.mxu0 0
        %289 = vmatpush1.bf16.msra.mxu0 0
        %290 = vmatprep.subr.bf16.mxu0 0
        %291 = vmatpush1.bf16.msra.mxu0 0
        %292 = vmatprep.subr.bf16.mxu0 0
        %293 = vmatpush1.bf16.msra.mxu0 0
        %294 = vmatprep.subr.bf16.mxu0 0
        %295 = vmatpush1.bf16.msra.mxu0 0
        %296 = vmatprep.subr.bf16.mxu0 0
        %297 = vmatpush1.bf16.msra.mxu0 0
        %298 = vmatprep.subr.bf16.mxu0 0
        %299 = vmatpush1.bf16.msra.mxu0 0
        %300 = vmatprep.subr.bf16.mxu0 0
        %301 = vmatpush1.bf16.msra.mxu0 0
        %302 = vmatprep.subr.bf16.mxu0 0
        %303 = vmatpush1.bf16.msra.mxu0 0
        %304 = vmatprep.subr.bf16.mxu0 0
        %305 = vmatpush1.bf16.msra.mxu0 0
        %306 = vmatprep.subr.bf16.mxu0 0
        %307 = vmatpush1.bf16.msra.mxu0 0
        %308 = vmatprep.subr.bf16.mxu0 0
        %309 = vmatpush1.bf16.msra.mxu0 0
        %310 = vmatprep.subr.bf16.mxu0 0
        %311 = vmatpush1.bf16.msra.mxu0 0
        %312 = vmatprep.mubr.bf16.mxu0 0
        %313 = vmatmul.mubr.bf16.gmra.mrb[0].mxu0 %v278
        %v314 = vpop.f32.mrb[0].mxu0
        %v315 = vadd.f32 0.0, %v314
        %v316 = vpop.f32.mrb[0].mxu0
        %v317 = vadd.f32 0.0, %v316
        %v318 = vpop.f32.mrb[0].mxu0
        %v319 = vpop.f32.mrb[0].mxu0
        %320 = vdwg.mxu0
        %321 = vmatprep.subr.bf16.mxu0 %v247
        %322 = vmatpush1.bf16.msra.mxu0 %v246
        %323 = vmatprep.subr.bf16.mxu0 %v255
        %324 = vmatpush1.bf16.msra.mxu0 %v254
        %325 = vmatprep.subr.bf16.mxu0 %v263
        %326 = vmatpush1.bf16.msra.mxu0 %v262
        %327 = vmatprep.subr.bf16.mxu0 %v271
        %328 = vmatpush1.bf16.msra.mxu0 %v270
        %329 = vmatprep.subr.bf16.mxu0 0
        %330 = vmatpush1.bf16.msra.mxu0 0
        %331 = vmatprep.subr.bf16.mxu0 0
        %332 = vmatpush1.bf16.msra.mxu0 0
        %333 = vmatprep.subr.bf16.mxu0 0
        %334 = vmatpush1.bf16.msra.mxu0 0
        %335 = vmatprep.subr.bf16.mxu0 0
        %336 = vmatpush1.bf16.msra.mxu0 0
        %337 = vmatprep.subr.bf16.mxu0 0
        %338 = vmatpush1.bf16.msra.mxu0 0
        %339 = vmatprep.subr.bf16.mxu0 0
        %340 = vmatpush1.bf16.msra.mxu0 0
        %341 = vmatprep.subr.bf16.mxu0 0
        %342 = vmatpush1.bf16.msra.mxu0 0
        %343 = vmatprep.subr.bf16.mxu0 0
        %344 = vmatpush1.bf16.msra.mxu0 0
        %345 = vmatprep.subr.bf16.mxu0 0
        %346 = vmatpush1.bf16.msra.mxu0 0
        %347 = vmatprep.subr.bf16.mxu0 0
        %348 = vmatpush1.bf16.msra.mxu0 0
        %349 = vmatprep.subr.bf16.mxu0 0
        %350 = vmatpush1.bf16.msra.mxu0 0
        %351 = vmatprep.subr.bf16.mxu0 0
        %352 = vmatpush1.bf16.msra.mxu0 0
        %353 = vmatprep.mubr.bf16.mxu0 0
        %354 = vmatmul.mubr.bf16.gmra.mrb[0].mxu0 %v278
        %v355 = vpop.f32.mrb[0].mxu0
        %v356 = vadd.f32 0.0, %v355
        %v357 = vpop.f32.mrb[0].mxu0
        %v358 = vadd.f32 0.0, %v357
        %v359 = vpop.f32.mrb[0].mxu0
        %v360 = vpop.f32.mrb[0].mxu0
        %361 = vdwg.mxu0
        %362 = vmatprep.subr.bf16.mxu0 %v249
        %363 = vmatpush1.bf16.msra.mxu0 %v248
        %364 = vmatprep.subr.bf16.mxu0 %v257
        %365 = vmatpush1.bf16.msra.mxu0 %v256
        %366 = vmatprep.subr.bf16.mxu0 %v265
        %367 = vmatpush1.bf16.msra.mxu0 %v264
        %368 = vmatprep.subr.bf16.mxu0 %v273
        %369 = vmatpush1.bf16.msra.mxu0 %v272
        %370 = vmatprep.subr.bf16.mxu0 0
        %371 = vmatpush1.bf16.msra.mxu0 0
        %372 = vmatprep.subr.bf16.mxu0 0
        %373 = vmatpush1.bf16.msra.mxu0 0
        %374 = vmatprep.subr.bf16.mxu0 0
        %375 = vmatpush1.bf16.msra.mxu0 0
        %376 = vmatprep.subr.bf16.mxu0 0
        %377 = vmatpush1.bf16.msra.mxu0 0
        %378 = vmatprep.subr.bf16.mxu0 0
        %379 = vmatpush1.bf16.msra.mxu0 0
        %380 = vmatprep.subr.bf16.mxu0 0
        %381 = vmatpush1.bf16.msra.mxu0 0
        %382 = vmatprep.subr.bf16.mxu0 0
        %383 = vmatpush1.bf16.msra.mxu0 0
        %384 = vmatprep.subr.bf16.mxu0 0
        %385 = vmatpush1.bf16.msra.mxu0 0
        %386 = vmatprep.subr.bf16.mxu0 0
        %387 = vmatpush1.bf16.msra.mxu0 0
        %388 = vmatprep.subr.bf16.mxu0 0
        %389 = vmatpush1.bf16.msra.mxu0 0
        %390 = vmatprep.subr.bf16.mxu0 0
        %391 = vmatpush1.bf16.msra.mxu0 0
        %392 = vmatprep.subr.bf16.mxu0 0
        %393 = vmatpush1.bf16.msra.mxu0 0
        %394 = vmatprep.mubr.bf16.mxu0 0
        %395 = vmatmul.mubr.bf16.gmra.mrb[0].mxu0 %v278
        %v396 = vpop.f32.mrb[0].mxu0
        %v397 = vadd.f32 0.0, %v396
        %v398 = vpop.f32.mrb[0].mxu0
        %v399 = vadd.f32 0.0, %v398
        %v400 = vpop.f32.mrb[0].mxu0
        %v401 = vpop.f32.mrb[0].mxu0
        %402 = vdwg.mxu0
        %403 = vmatprep.subr.bf16.mxu0 %v251
        %404 = vmatpush1.bf16.msra.mxu0 %v250
        %405 = vmatprep.subr.bf16.mxu0 %v259
        %406 = vmatpush1.bf16.msra.mxu0 %v258
        %407 = vmatprep.subr.bf16.mxu0 %v267
        %408 = vmatpush1.bf16.msra.mxu0 %v266
        %409 = vmatprep.subr.bf16.mxu0 %v275
        %410 = vmatpush1.bf16.msra.mxu0 %v274
        %411 = vmatprep.subr.bf16.mxu0 0
        %412 = vmatpush1.bf16.msra.mxu0 0
        %413 = vmatprep.subr.bf16.mxu0 0
        %414 = vmatpush1.bf16.msra.mxu0 0
        %415 = vmatprep.subr.bf16.mxu0 0
        %416 = vmatpush1.bf16.msra.mxu0 0
        %417 = vmatprep.subr.bf16.mxu0 0
        %418 = vmatpush1.bf16.msra.mxu0 0
        %419 = vmatprep.subr.bf16.mxu0 0
        %420 = vmatpush1.bf16.msra.mxu0 0
        %421 = vmatprep.subr.bf16.mxu0 0
        %422 = vmatpush1.bf16.msra.mxu0 0
        %423 = vmatprep.subr.bf16.mxu0 0
        %424 = vmatpush1.bf16.msra.mxu0 0
        %425 = vmatprep.subr.bf16.mxu0 0
        %426 = vmatpush1.bf16.msra.mxu0 0
        %427 = vmatprep.subr.bf16.mxu0 0
        %428 = vmatpush1.bf16.msra.mxu0 0
        %429 = vmatprep.subr.bf16.mxu0 0
        %430 = vmatpush1.bf16.msra.mxu0 0
        %431 = vmatprep.subr.bf16.mxu0 0
        %432 = vmatpush1.bf16.msra.mxu0 0
        %433 = vmatprep.subr.bf16.mxu0 0
        %434 = vmatpush1.bf16.msra.mxu0 0
        %435 = vmatprep.mubr.bf16.mxu0 0
        %436 = vmatmul.mubr.bf16.gmra.mrb[0].mxu0 %v278
        %v437 = vpop.f32.mrb[0].mxu0
        %v438 = vadd.f32 0.0, %v437
        %v439 = vpop.f32.mrb[0].mxu0
        %v440 = vadd.f32 0.0, %v439
        %v441 = vpop.f32.mrb[0].mxu0
        %v442 = vpop.f32.mrb[0].mxu0
        %443 = vdwg.mxu0
        %vm444 = vcmp.gt.f32.partialorder %v315, 0.0
        %vm445 = vcmp.gt.f32.partialorder %v317, 0.0
        %vm446 = vcmp.gt.f32.partialorder %v356, 0.0
        %vm447 = vcmp.gt.f32.partialorder %v358, 0.0
        %vm448 = vcmp.gt.f32.partialorder %v397, 0.0
        %vm449 = vcmp.gt.f32.partialorder %v399, 0.0
        %vm450 = vcmp.gt.f32.partialorder %v438, 0.0
        %vm451 = vcmp.gt.f32.partialorder %v440, 0.0
        %v452 = vmul.f32 %v315, 0.2
        %v453 = vmul.f32 %v317, 0.2
        %v454 = vmul.f32 %v356, 0.2
        %v455 = vmul.f32 %v358, 0.2
        %v456 = vmul.f32 %v397, 0.2
        %v457 = vmul.f32 %v399, 0.2
        %v458 = vmul.f32 %v438, 0.2
        %v459 = vmul.f32 %v440, 0.2
        %v460 = vsel %vm444, %v315, %v452
        %v461 = vsel %vm445, %v317, %v453
        %v462 = vsel %vm446, %v356, %v454
        %v463 = vsel %vm447, %v358, %v455
        %v464 = vsel %vm448, %v397, %v456
        %v465 = vsel %vm449, %v399, %v457
        %v466 = vsel %vm450, %v438, %v458
        %v467 = vsel %vm451, %v440, %v459
        %468 = vst [vmem:[%s174] sm:$0xff] %v460
        %469 = vst [vmem:[%s174 + $0x8] sm:$0xff] %v461
        %470 = vst [vmem:[%s174 + $0x10] sm:$0xff] %v462
        %471 = vst [vmem:[%s174 + $0x18] sm:$0xff] %v463
        %472 = vst [vmem:[%s174 + $0x20] sm:$0xff] %v464
        %473 = vst [vmem:[%s174 + $0x28] sm:$0xff] %v465
        %474 = vst [vmem:[%s174 + $0x30] sm:$0xff] %v466
        %475 = vst [vmem:[%s174 + $0x38] sm:$0xff] %v467
        %s476 = sand.u32 %s75, 1
        %s477 = scalar_lea.sflag [#allocation4], %s476
        %s478 = sand.u32 %s75, 1
        %s479 = smul.addr %s478, 64
        %s480 = scalar_lea.vmem [#allocation7], %s479
        // Predicated region
        $region37: #{tpu_custom_call.1} parent=27 // pred_check
          %p481 = pneg %p85
        $region38: #{tpu_custom_call.1} parent=27 // pred_check_branch
          %483 = sbr.rel (%p481) target = $region40
        $region39: #{tpu_custom_call.1} parent=27 // pred_region
          %s484 = smul.u32 8, %s20
          %s486 = ssub.s32 1024, 1024
          %487 = vsyncadd %s477, %s486
          %s488 = smul.addr %s484, 128
          %s489 = scalar_lea.hbm %s2, %s488
          %s491 = sshll.u32 %s480, 4
          %s492 = int_to_ptr.vmem [resolvable:$true] %s491
          %494 = dma.vmem_to_hbm [thread:$0]  %s492, 1024, %s489, %s477
        $region40: #{tpu_custom_call.1} parent=27 // pred_fallthru
          _
      $region28: #{tpu_custom_call.1} parent=5 // pred_fallthru
        _
      %p495 = scmp.le.s32.totalorder 2, %s15
      // Predicated region
      $region41: #{tpu_custom_call.1} parent=5 // pred_check
        %p496 = pneg %p495
      $region42: #{tpu_custom_call.1} parent=5 // pred_check_branch
        %498 = sbr.rel (%p496) target = $region44
      $region43: #{tpu_custom_call.1} parent=5 // pred_region
        %s499 = ssub.s32 %s15, 2
        // Predicated region
        $region45: #{tpu_custom_call.1} parent=43 // pred_check
          %p500 = pneg %p91
        $region46: #{tpu_custom_call.1} parent=43 // pred_check_branch
          %502 = sbr.rel (%p500) target = $region48
        $region47: #{tpu_custom_call.1} parent=43 // pred_region
          %s503 = sand.u32 %s76, 1
          %s504 = scalar_lea.sflag [#allocation4], %s503
          %s505 = sand.u32 %s76, 1
          %s506 = smul.addr %s505, 64
          %s507 = scalar_lea.vmem [#allocation7], %s506
          %508 = dma.done %s504, 1024
        $region48: #{tpu_custom_call.1} parent=43 // pred_fallthru
          _
      $region44: #{tpu_custom_call.1} parent=5 // pred_fallthru
        _
    $region6: #{tpu_custom_call.1} parent=1 // loop_footer
      %s19 = sadd.s32 1, %s15
    $region7: #{tpu_custom_call.1} parent=1 // loop_footer_branch
      %14 = sbr.rel target = $region3
    $region8: #{tpu_custom_call.1} parent=1 // loop_exit
      _
    %509 = vsyncpa [#allocation3], 1
    %s510 = scalar_lea.sflag [#allocation3], 1
    %511 = vsyncpa %s510, 1
    %512 = vsyncpa [#allocation6], 1
    %s513 = scalar_lea.sflag [#allocation6], 1
    %514 = vsyncpa %s513, 1
    %515 = vsyncpa [#allocation4], 1
    %s516 = scalar_lea.sflag [#allocation4], 1
    %517 = vsyncpa %s516, 1

</llo_original>
